<compile_context>
chip_gen: v6e
topology: v6e:2x2x1
jax: 0.10.0
libtpu: 0.0.40
codegen_flags: <defaults>
</compile_context>

<pallas_src>
import jax
import jax.numpy as jnp
from jax.experimental import pallas as pl
from jax.experimental.pallas import tpu as pltpu

_LANE = 128
_MAX_TILE_B = 4096        # conservative cap: fits scoped-VMEM defaults on all gens


def _round_up(x, m):
    return (x + m - 1) // m * m


def _make_mlp_kernel(num_layers, out_widths):
    """Builds a fused kernel for a fixed layer count / (static) layer widths."""

    def kernel(*refs):
        x_ref = refs[0]                          # bf16 (tile_b, size_in)
        w_refs = refs[1:1 + num_layers]          # bf16, unpadded except last N
        b_ref = refs[1 + num_layers]             # f32, (num_layers, max_out)
        o_ref = refs[2 + num_layers]             # f32, (tile_b, pad_out_last)

        h = x_ref[...]
        for li in range(num_layers):
            # MXU matmul: bf16 x bf16 -> f32 accumulation
            y = jnp.dot(h, w_refs[li][...],
                        preferred_element_type=jnp.float32)
            y = y + b_ref[li:li + 1, :out_widths[li]]      # f32 bias broadcast
            if li < num_layers - 1:
                y = jnp.maximum(y, 0.0)          # ReLU (dropout = identity)
                h = y.astype(jnp.bfloat16)       # feed next MXU pass in bf16
            else:
                o_ref[...] = y.astype(o_ref.dtype)

    return kernel


def prepare_mlp_params(params):
    """One-time prep (hoisted out of the forward):
       * cast weights to bf16
       * pad ONLY the final layer's output dim to 128 lanes (lane-dense store)
       * consolidate all biases into a single (num_layers, max_out) f32 array.
    """
    num_layers = len(params)
    size_out = params[-1][0].shape[1]

    w_prep = []
    out_widths = []
    for li, (w, _) in enumerate(params):
        if li == num_layers - 1:
            pad_out = _round_up(w.shape[1], _LANE)
            wp = jnp.zeros((w.shape[0], pad_out), jnp.float32)
            wp = wp.at[:, :w.shape[1]].set(w)
        else:
            pad_out = w.shape[1]
            wp = w
        w_prep.append(wp.astype(jnp.bfloat16))
        out_widths.append(pad_out)

    max_out = max(out_widths)
    b_all = jnp.zeros((num_layers, max_out), jnp.float32)
    for li, (_, b) in enumerate(params):
        b_all = b_all.at[li, :b.shape[-1]].set(b.reshape(-1))

    return tuple(w_prep), b_all, tuple(out_widths), size_out


def mlp_forward(x, w_prep, b_all, out_widths, size_out, *, tile_b=None):
    """x: [B, size_in] f32.  w_prep/b_all/out_widths from prepare_mlp_params."""
    B, size_in = x.shape
    num_layers = len(w_prep)
    pad_out_last = out_widths[-1]

    # ---- tile sizing: one grid step for small batches, 16-row granularity ----
    if tile_b is None:
        tile_b = min(_round_up(B, 16), _MAX_TILE_B)
    tile_b = _round_up(max(int(tile_b), 16), 16)
    B_pad = _round_up(B, tile_b)

    x_bf = x.astype(jnp.bfloat16)                # no K padding; just the cast
    if B_pad != B:
        x_bf = jnp.pad(x_bf, ((0, B_pad - B), (0, 0)))

    grid = (B_pad // tile_b,)

    in_specs = [pl.BlockSpec((tile_b, size_in), lambda i: (i, 0))]
    for w in w_prep:
        in_specs.append(pl.BlockSpec(w.shape, lambda i: (0, 0)))
    in_specs.append(pl.BlockSpec(b_all.shape, lambda i: (0, 0)))
    out_specs = pl.BlockSpec((tile_b, pad_out_last), lambda i: (i, 0))

    flops = 2 * B_pad * sum(int(w.shape[0]) * int(w.shape[1]) for w in w_prep)
    bytes_accessed = (x_bf.size * 2
                      + sum(int(w.size) * 2 for w in w_prep)
                      + int(b_all.size) * 4
                      + B_pad * pad_out_last * 4)

    kernel = _make_mlp_kernel(num_layers, out_widths)

    out_full = pl.pallas_call(
        kernel,
        out_shape=jax.ShapeDtypeStruct((B_pad, pad_out_last), jnp.float32),
        grid_spec=pltpu.PrefetchScalarGridSpec(
            num_scalar_prefetch=0,
            grid=grid,
            in_specs=in_specs,
            out_specs=out_specs,
        ),
        compiler_params=pltpu.CompilerParams(
            dimension_semantics=("parallel",)),
        cost_estimate=pl.CostEstimate(
            flops=flops, transcendentals=0, bytes_accessed=bytes_accessed),
    )(x_bf, *w_prep, b_all)

    # strip batch + lane padding (fuses with surrounding XLA under jit)
    return out_full[:B, :size_out]


def init_mlp_params(key, size_in, size_out, features=(64, 64, 64, 64)):
    """Deterministic init mimicking nn.Linear's uniform(-1/sqrt(fan_in), ...)."""
    dims = [size_in] + list(features) + [size_out]
    params = []
    for li in range(len(dims) - 1):
        fan_in, fan_out = dims[li], dims[li + 1]
        key, kw, kb = jax.random.split(key, 3)
        bound = 1.0 / (fan_in ** 0.5)
        # stored already transposed: (in, out)
        w = jax.random.uniform(kw, (fan_in, fan_out), jnp.float32, -bound, bound)
        b = jax.random.uniform(kb, (1, fan_out), jnp.float32, -bound, bound)
        params.append((w, b))
    return params


def mlp_reference(x, params):
    """Reference with the same numerics as the kernel (bf16 matmul operands,
    f32 accumulation / bias / ReLU).  Note: validates the kernel against its
    own precision choice; the pure-f32 nn.Linear result differs by ~bf16 eps."""
    h = x
    n = len(params)
    for li, (w, b) in enumerate(params):
        y = jnp.dot(h.astype(jnp.bfloat16), w.astype(jnp.bfloat16),
                    preferred_element_type=jnp.float32) + b
        if li < n - 1:
            y = jnp.maximum(y, 0.0)
        h = y
    return h


if __name__ == "__main__":
    key = jax.random.PRNGKey(0)
    size_in, size_out = 32, 16
    batch = 256          # small batch -> one tile, grid=(1,)

    kx, kp = jax.random.split(key)
    x = jax.random.normal(kx, (batch, size_in), jnp.float32)
    params = init_mlp_params(kp, size_in, size_out, features=(64, 64, 64, 64))

    # One-time parameter preparation (padding / bf16 cast / bias packing).
    w_prep, b_all, out_widths, sz_out = prepare_mlp_params(params)

    fwd = jax.jit(
        lambda xx: mlp_forward(xx, w_prep, b_all, out_widths, sz_out))
    out = jax.block_until_ready(fwd(x))

    ref = mlp_reference(x, params)
    assert out.shape == (batch, size_out)
    assert jnp.allclose(out, ref, atol=1e-3, rtol=1e-3), "mismatch vs reference"

    print("KERNEL_OK")
</pallas_src>

<mosaic_0001>
module attributes {stable_mosaic.version = 11 : i64} {
  func.func @kernel(%arg0: i32, %arg1: memref<256x32xbf16, #tpu.memory_space<vmem>>, %arg2: memref<32x64xbf16, #tpu.memory_space<vmem>>, %arg3: memref<64x64xbf16, #tpu.memory_space<vmem>>, %arg4: memref<64x64xbf16, #tpu.memory_space<vmem>>, %arg5: memref<64x64xbf16, #tpu.memory_space<vmem>>, %arg6: memref<64x128xbf16, #tpu.memory_space<vmem>>, %arg7: memref<5x128xf32, #tpu.memory_space<vmem>>, %arg8: memref<256x128xf32, #tpu.memory_space<vmem>>) attributes {dimension_semantics = [#tpu.dimension_semantics<parallel>], iteration_bounds = array<i64: 1>, scalar_prefetch = 0 : i64, scratch_operands = 0 : i64, tpu.core_type = #tpu.core_type<tc>, window_params = [{transform_indices = @transform_0, window_bounds = array<i64: 256, 32>}, {pipeline_mode = #tpu.pipeline_mode<synchronous>, transform_indices = @transform_1, window_bounds = array<i64: 32, 64>}, {pipeline_mode = #tpu.pipeline_mode<synchronous>, transform_indices = @transform_2, window_bounds = array<i64: 64, 64>}, {pipeline_mode = #tpu.pipeline_mode<synchronous>, transform_indices = @transform_3, window_bounds = array<i64: 64, 64>}, {pipeline_mode = #tpu.pipeline_mode<synchronous>, transform_indices = @transform_4, window_bounds = array<i64: 64, 64>}, {pipeline_mode = #tpu.pipeline_mode<synchronous>, transform_indices = @transform_5, window_bounds = array<i64: 64, 128>}, {pipeline_mode = #tpu.pipeline_mode<synchronous>, transform_indices = @transform_6, window_bounds = array<i64: 5, 128>}, {transform_indices = @transform_7, window_bounds = array<i64: 256, 128>}]} {
    %c0 = arith.constant 0 : index
    %c0_0 = arith.constant 0 : index
    %0 = vector.load %arg1[%c0, %c0_0] : memref<256x32xbf16, #tpu.memory_space<vmem>>, vector<256x32xbf16>
    %c0_1 = arith.constant 0 : index
    %c0_2 = arith.constant 0 : index
    %1 = vector.load %arg2[%c0_1, %c0_2] : memref<32x64xbf16, #tpu.memory_space<vmem>>, vector<32x64xbf16>
    %cst = arith.constant dense<0.000000e+00> : vector<256x64xf32>
    %2 = tpu.matmul %0, %1, %cst {dimension_numbers = #tpu.dot_dimension_numbers<[1], [0], [0], [1], [0, 0, 1, 1], [], []>} : vector<256x32xbf16>, vector<32x64xbf16>, vector<256x64xf32> -> vector<256x64xf32>
    %c0_3 = arith.constant 0 : index
    %c0_4 = arith.constant 0 : index
    %3 = vector.load %arg7[%c0_3, %c0_4] : memref<5x128xf32, #tpu.memory_space<vmem>>, vector<1x64xf32>
    %4 = vector.broadcast %3 : vector<1x64xf32> to vector<256x64xf32>
    %5 = arith.addf %2, %4 : vector<256x64xf32>
    %cst_5 = arith.constant 0.000000e+00 : f32
    %6 = vector.broadcast %cst_5 : f32 to vector<256x64xf32>
    %7 = arith.maximumf %5, %6 : vector<256x64xf32>
    %8 = arith.truncf %7 : vector<256x64xf32> to vector<256x64xbf16>
    %c0_6 = arith.constant 0 : index
    %c0_7 = arith.constant 0 : index
    %9 = vector.load %arg3[%c0_6, %c0_7] : memref<64x64xbf16, #tpu.memory_space<vmem>>, vector<64x64xbf16>
    %cst_8 = arith.constant dense<0.000000e+00> : vector<256x64xf32>
    %10 = tpu.matmul %8, %9, %cst_8 {dimension_numbers = #tpu.dot_dimension_numbers<[1], [0], [0], [1], [0, 0, 1, 1], [], []>} : vector<256x64xbf16>, vector<64x64xbf16>, vector<256x64xf32> -> vector<256x64xf32>
    %c1 = arith.constant 1 : index
    %c0_9 = arith.constant 0 : index
    %11 = vector.load %arg7[%c1, %c0_9] : memref<5x128xf32, #tpu.memory_space<vmem>>, vector<1x64xf32>
    %12 = vector.broadcast %11 : vector<1x64xf32> to vector<256x64xf32>
    %13 = arith.addf %10, %12 : vector<256x64xf32>
    %cst_10 = arith.constant 0.000000e+00 : f32
    %14 = vector.broadcast %cst_10 : f32 to vector<256x64xf32>
    %15 = arith.maximumf %13, %14 : vector<256x64xf32>
    %16 = arith.truncf %15 : vector<256x64xf32> to vector<256x64xbf16>
    %c0_11 = arith.constant 0 : index
    %c0_12 = arith.constant 0 : index
    %17 = vector.load %arg4[%c0_11, %c0_12] : memref<64x64xbf16, #tpu.memory_space<vmem>>, vector<64x64xbf16>
    %cst_13 = arith.constant dense<0.000000e+00> : vector<256x64xf32>
    %18 = tpu.matmul %16, %17, %cst_13 {dimension_numbers = #tpu.dot_dimension_numbers<[1], [0], [0], [1], [0, 0, 1, 1], [], []>} : vector<256x64xbf16>, vector<64x64xbf16>, vector<256x64xf32> -> vector<256x64xf32>
    %c2 = arith.constant 2 : index
    %c0_14 = arith.constant 0 : index
    %19 = vector.load %arg7[%c2, %c0_14] : memref<5x128xf32, #tpu.memory_space<vmem>>, vector<1x64xf32>
    %20 = vector.broadcast %19 : vector<1x64xf32> to vector<256x64xf32>
    %21 = arith.addf %18, %20 : vector<256x64xf32>
    %cst_15 = arith.constant 0.000000e+00 : f32
    %22 = vector.broadcast %cst_15 : f32 to vector<256x64xf32>
    %23 = arith.maximumf %21, %22 : vector<256x64xf32>
    %24 = arith.truncf %23 : vector<256x64xf32> to vector<256x64xbf16>
    %c0_16 = arith.constant 0 : index
    %c0_17 = arith.constant 0 : index
    %25 = vector.load %arg5[%c0_16, %c0_17] : memref<64x64xbf16, #tpu.memory_space<vmem>>, vector<64x64xbf16>
    %cst_18 = arith.constant dense<0.000000e+00> : vector<256x64xf32>
    %26 = tpu.matmul %24, %25, %cst_18 {dimension_numbers = #tpu.dot_dimension_numbers<[1], [0], [0], [1], [0, 0, 1, 1], [], []>} : vector<256x64xbf16>, vector<64x64xbf16>, vector<256x64xf32> -> vector<256x64xf32>
    %c3 = arith.constant 3 : index
    %c0_19 = arith.constant 0 : index
    %27 = vector.load %arg7[%c3, %c0_19] : memref<5x128xf32, #tpu.memory_space<vmem>>, vector<1x64xf32>
    %28 = vector.broadcast %27 : vector<1x64xf32> to vector<256x64xf32>
    %29 = arith.addf %26, %28 : vector<256x64xf32>
    %cst_20 = arith.constant 0.000000e+00 : f32
    %30 = vector.broadcast %cst_20 : f32 to vector<256x64xf32>
    %31 = arith.maximumf %29, %30 : vector<256x64xf32>
    %32 = arith.truncf %31 : vector<256x64xf32> to vector<256x64xbf16>
    %c0_21 = arith.constant 0 : index
    %c0_22 = arith.constant 0 : index
    %33 = vector.load %arg6[%c0_21, %c0_22] : memref<64x128xbf16, #tpu.memory_space<vmem>>, vector<64x128xbf16>
    %cst_23 = arith.constant dense<0.000000e+00> : vector<256x128xf32>
    %34 = tpu.matmul %32, %33, %cst_23 {dimension_numbers = #tpu.dot_dimension_numbers<[1], [0], [0], [1], [0, 0, 1, 1], [], []>} : vector<256x64xbf16>, vector<64x128xbf16>, vector<256x128xf32> -> vector<256x128xf32>
    %c4 = arith.constant 4 : index
    %c0_24 = arith.constant 0 : index
    %35 = vector.load %arg7[%c4, %c0_24] : memref<5x128xf32, #tpu.memory_space<vmem>>, vector<1x128xf32>
    %36 = vector.broadcast %35 : vector<1x128xf32> to vector<256x128xf32>
    %37 = arith.addf %34, %36 : vector<256x128xf32>
    %c0_25 = arith.constant 0 : index
    %c0_26 = arith.constant 0 : index
    %38 = vector.load %arg8[%c0_25, %c0_26] : memref<256x128xf32, #tpu.memory_space<vmem>>, vector<256x128xf32>
    tpu.vector_store %arg8[%c0_25, %c0_26], %37 {strides = array<i32>} : memref<256x128xf32, #tpu.memory_space<vmem>>, vector<256x128xf32>,
    return
  }
  func.func @transform_0(%arg0: i32) -> (i32, i32) {
    %c0_i32 = arith.constant 0 : i32
    %c0_i32_0 = arith.constant 0 : i32
    return %arg0, %c0_i32 : i32, i32
  }
  func.func @transform_1(%arg0: i32) -> (i32, i32) {
    %c0_i32 = arith.constant 0 : i32
    %c0_i32_0 = arith.constant 0 : i32
    %c0_i32_1 = arith.constant 0 : i32
    return %c0_i32, %c0_i32_0 : i32, i32
  }
  func.func @transform_2(%arg0: i32) -> (i32, i32) {
    %c0_i32 = arith.constant 0 : i32
    %c0_i32_0 = arith.constant 0 : i32
    %c0_i32_1 = arith.constant 0 : i32
    return %c0_i32, %c0_i32_0 : i32, i32
  }
  func.func @transform_3(%arg0: i32) -> (i32, i32) {
    %c0_i32 = arith.constant 0 : i32
    %c0_i32_0 = arith.constant 0 : i32
    %c0_i32_1 = arith.constant 0 : i32
    return %c0_i32, %c0_i32_0 : i32, i32
  }
  func.func @transform_4(%arg0: i32) -> (i32, i32) {
    %c0_i32 = arith.constant 0 : i32
    %c0_i32_0 = arith.constant 0 : i32
    %c0_i32_1 = arith.constant 0 : i32
    return %c0_i32, %c0_i32_0 : i32, i32
  }
  func.func @transform_5(%arg0: i32) -> (i32, i32) {
    %c0_i32 = arith.constant 0 : i32
    %c0_i32_0 = arith.constant 0 : i32
    %c0_i32_1 = arith.constant 0 : i32
    return %c0_i32, %c0_i32_0 : i32, i32
  }
  func.func @transform_6(%arg0: i32) -> (i32, i32) {
    %c0_i32 = arith.constant 0 : i32
    %c0_i32_0 = arith.constant 0 : i32
    %c0_i32_1 = arith.constant 0 : i32
    return %c0_i32, %c0_i32_0 : i32, i32
  }
  func.func @transform_7(%arg0: i32) -> (i32, i32) {
    %c0_i32 = arith.constant 0 : i32
    %c0_i32_0 = arith.constant 0 : i32
    return %arg0, %c0_i32 : i32, i32
  }
}

</mosaic_0001>

<llo_original>
// kernel: _lambda_.1
$region0: #{_lambda_.1}
  #allocation0 [shape = 'u32[]', space=smem, size = 0x4, offset = 0x4, fixed_abs, tag = 'smem constant byte address 0x4 - core index']
  #allocation1 [shape = 'u32[144,128]{1,0:T(1,128)}', space=vmem, size = 0x12000, scoped, tag = 'internal scratch']
  %s0 = inlined_call_operand.vmem [shape: bf16[256,32], index: 0, kind: input, shape index: {}]
  %s1 = inlined_call_operand.vmem [shape: bf16[32,64], index: 1, kind: input, shape index: {}]
  %s2 = inlined_call_operand.vmem [shape: bf16[64,64], index: 2, kind: input, shape index: {}]
  %s3 = inlined_call_operand.vmem [shape: bf16[64,64], index: 3, kind: input, shape index: {}]
  %s4 = inlined_call_operand.vmem [shape: bf16[64,64], index: 4, kind: input, shape index: {}]
  %s5 = inlined_call_operand.vmem [shape: bf16[64,128], index: 5, kind: input, shape index: {}]
  %s6 = inlined_call_operand.vmem [shape: f32[5,128], index: 6, kind: input, shape index: {}]
  %s7 = inlined_call_operand.vmem [shape: f32[256,128], index: 7, kind: output, shape index: {}]
  %s8 = sld [smem:[#allocation0]]
  $region38: #{_lambda_.1} parent=0
    _
  %s10 = ssub.s32 1, %s8
  %s11 = scalar_select 0, %s10, %s8
  // Predicated region
  $region2: #{_lambda_.1} parent=0 // pred_check
    _
  $region3: #{_lambda_.1} parent=0 // pred_check_branch
    %13 = sbr.rel (0) target = $region5
  $region4: #{_lambda_.1} parent=0 // pred_region
    _
  $region5: #{_lambda_.1} parent=0 // pred_fallthru
    _
  // Predicated region
  $region6: #{_lambda_.1} parent=0 // pred_check
    _
  $region7: #{_lambda_.1} parent=0 // pred_check_branch
    %15 = sbr.rel (0) target = $region9
  $region8: #{_lambda_.1} parent=0 // pred_region
    _
  $region9: #{_lambda_.1} parent=0 // pred_fallthru
    _
  // Predicated region
  $region10: #{_lambda_.1} parent=0 // pred_check
    _
  $region11: #{_lambda_.1} parent=0 // pred_check_branch
    %17 = sbr.rel (0) target = $region13
  $region12: #{_lambda_.1} parent=0 // pred_region
    _
  $region13: #{_lambda_.1} parent=0 // pred_fallthru
    _
  // Predicated region
  $region14: #{_lambda_.1} parent=0 // pred_check
    _
  $region15: #{_lambda_.1} parent=0 // pred_check_branch
    %19 = sbr.rel (0) target = $region17
  $region16: #{_lambda_.1} parent=0 // pred_region
    _
  $region17: #{_lambda_.1} parent=0 // pred_fallthru
    _
  // Predicated region
  $region18: #{_lambda_.1} parent=0 // pred_check
    _
  $region19: #{_lambda_.1} parent=0 // pred_check_branch
    %21 = sbr.rel (0) target = $region21
  $region20: #{_lambda_.1} parent=0 // pred_region
    _
  $region21: #{_lambda_.1} parent=0 // pred_fallthru
    _
  // Predicated region
  $region22: #{_lambda_.1} parent=0 // pred_check
    _
  $region23: #{_lambda_.1} parent=0 // pred_check_branch
    %23 = sbr.rel (0) target = $region25
  $region24: #{_lambda_.1} parent=0 // pred_region
    _
  $region25: #{_lambda_.1} parent=0 // pred_fallthru
    _
  // Predicated region
  $region26: #{_lambda_.1} parent=0 // pred_check
    _
  $region27: #{_lambda_.1} parent=0 // pred_check_branch
    %25 = sbr.rel (0) target = $region29
  $region28: #{_lambda_.1} parent=0 // pred_region
    _
  $region29: #{_lambda_.1} parent=0 // pred_fallthru
    _
  %v27 = vld [vmem:[%s0] sm:$0xf]
  %v28 = vld [vmem:[%s0 + $0x4] sm:$0xf]
  %v29 = vld [vmem:[%s0 + $0x8] sm:$0xf]
  %v30 = vld [vmem:[%s0 + $0xc] sm:$0xf]
  %v31 = vld [vmem:[%s0 + $0x10] sm:$0xf]
  %v32 = vld [vmem:[%s0 + $0x14] sm:$0xf]
  %v33 = vld [vmem:[%s0 + $0x18] sm:$0xf]
  %v34 = vld [vmem:[%s0 + $0x1c] sm:$0xf]
  %v35 = vld [vmem:[%s0 + $0x20] sm:$0xf]
  %v36 = vld [vmem:[%s0 + $0x24] sm:$0xf]
  %v37 = vld [vmem:[%s0 + $0x28] sm:$0xf]
  %v38 = vld [vmem:[%s0 + $0x2c] sm:$0xf]
  %v39 = vld [vmem:[%s0 + $0x30] sm:$0xf]
  %v40 = vld [vmem:[%s0 + $0x34] sm:$0xf]
  %v41 = vld [vmem:[%s0 + $0x38] sm:$0xf]
  %v42 = vld [vmem:[%s0 + $0x3c] sm:$0xf]
  %v43 = vld [vmem:[%s0 + $0x40] sm:$0xf]
  %v44 = vld [vmem:[%s0 + $0x44] sm:$0xf]
  %v45 = vld [vmem:[%s0 + $0x48] sm:$0xf]
  %v46 = vld [vmem:[%s0 + $0x4c] sm:$0xf]
  %v47 = vld [vmem:[%s0 + $0x50] sm:$0xf]
  %v48 = vld [vmem:[%s0 + $0x54] sm:$0xf]
  %v49 = vld [vmem:[%s0 + $0x58] sm:$0xf]
  %v50 = vld [vmem:[%s0 + $0x5c] sm:$0xf]
  %v51 = vld [vmem:[%s0 + $0x60] sm:$0xf]
  %v52 = vld [vmem:[%s0 + $0x64] sm:$0xf]
  %v53 = vld [vmem:[%s0 + $0x68] sm:$0xf]
  %v54 = vld [vmem:[%s0 + $0x6c] sm:$0xf]
  %v55 = vld [vmem:[%s0 + $0x70] sm:$0xf]
  %v56 = vld [vmem:[%s0 + $0x74] sm:$0xf]
  %v57 = vld [vmem:[%s0 + $0x78] sm:$0xf]
  %v58 = vld [vmem:[%s0 + $0x7c] sm:$0xf]
  %v59 = vld [vmem:[%s1] sm:$0xf]
  %v60 = vld [vmem:[%s1 + $0x4] sm:$0xf]
  %v61 = vld [vmem:[%s1 + $0x8] sm:$0xf]
  %v62 = vld [vmem:[%s1 + $0xc] sm:$0xf]
  %v63 = vld [vmem:[%s6] sm:$0x1]
  %v64 = vlaneseq
  %v65 = vshrl.u32 %v64, 7
  %v66 = vsub.s32 0, %v65
  %v67 = vrot.slane %v63, %v66
  %v100 = vunpack.c.l.b16 %v27
  %v101 = vunpack.c.l.b16 %v28
  %v102 = vunpack.c.l.b16 %v29
  %v103 = vunpack.c.l.b16 %v30
  %v104 = vunpack.c.l.b16 %v31
  %v105 = vunpack.c.l.b16 %v32
  %v106 = vunpack.c.l.b16 %v33
  %v107 = vunpack.c.l.b16 %v34
  %v108 = vunpack.c.l.b16 %v35
  %v109 = vunpack.c.l.b16 %v36
  %v110 = vunpack.c.l.b16 %v37
  %v111 = vunpack.c.l.b16 %v38
  %v112 = vunpack.c.l.b16 %v39
  %v113 = vunpack.c.l.b16 %v40
  %v114 = vunpack.c.l.b16 %v41
  %v115 = vunpack.c.l.b16 %v42
  %v116 = vunpack.c.l.b16 %v43
  %v117 = vunpack.c.l.b16 %v44
  %v118 = vunpack.c.l.b16 %v45
  %v119 = vunpack.c.l.b16 %v46
  %v120 = vunpack.c.l.b16 %v47
  %v121 = vunpack.c.l.b16 %v48
  %v122 = vunpack.c.l.b16 %v49
  %v123 = vunpack.c.l.b16 %v50
  %v124 = vunpack.c.l.b16 %v51
  %v125 = vunpack.c.l.b16 %v52
  %v126 = vunpack.c.l.b16 %v53
  %v127 = vunpack.c.l.b16 %v54
  %v128 = vunpack.c.l.b16 %v55
  %v129 = vunpack.c.l.b16 %v56
  %v130 = vunpack.c.l.b16 %v57
  %v131 = vunpack.c.l.b16 %v58
  %v132 = vpack.c.b16 %v101, %v100
  %v133 = vpack.c.b16 %v103, %v102
  %v134 = vpack.c.b16 %v105, %v104
  %v135 = vpack.c.b16 %v107, %v106
  %v136 = vpack.c.b16 %v109, %v108
  %v137 = vpack.c.b16 %v111, %v110
  %v138 = vpack.c.b16 %v113, %v112
  %v139 = vpack.c.b16 %v115, %v114
  %v140 = vpack.c.b16 %v117, %v116
  %v141 = vpack.c.b16 %v119, %v118
  %v142 = vpack.c.b16 %v121, %v120
  %v143 = vpack.c.b16 %v123, %v122
  %v144 = vpack.c.b16 %v125, %v124
  %v145 = vpack.c.b16 %v127, %v126
  %v146 = vpack.c.b16 %v129, %v128
  %v147 = vpack.c.b16 %v131, %v130
  %v152 = vunpack.c.l.b16 %v59
  %v153 = vunpack.c.l.b16 %v60
  %v154 = vunpack.c.l.b16 %v61
  %v155 = vunpack.c.l.b16 %v62
  %v156 = vpack.c.b16 %v153, %v152
  %v157 = vpack.c.b16 %v155, %v154
  %vm160 = vcmask 261120
  %v162 = vsel %vm160, %v132, 0
  %v165 = vsel %vm160, %v133, 0
  %v168 = vsel %vm160, %v134, 0
  %v171 = vsel %vm160, %v135, 0
  %v174 = vsel %vm160, %v136, 0
  %v177 = vsel %vm160, %v137, 0
  %v180 = vsel %vm160, %v138, 0
  %v183 = vsel %vm160, %v139, 0
  %v186 = vsel %vm160, %v140, 0
  %v189 = vsel %vm160, %v141, 0
  %v192 = vsel %vm160, %v142, 0
  %v195 = vsel %vm160, %v143, 0
  %v198 = vsel %vm160, %v144, 0
  %v201 = vsel %vm160, %v145, 0
  %v204 = vsel %vm160, %v146, 0
  %v207 = vsel %vm160, %v147, 0
  %209 = vmatprep.subr.bf16.mxu0 0
  %210 = vmatpush1.bf16.msra.mxu0 0
  %211 = vmatprep.subr.bf16.mxu0 0
  %212 = vmatpush1.bf16.msra.mxu0 0
  %213 = vmatprep.subr.bf16.mxu0 0
  %214 = vmatpush1.bf16.msra.mxu0 0
  %215 = vmatprep.subr.bf16.mxu0 0
  %216 = vmatpush1.bf16.msra.mxu0 0
  %217 = vmatprep.subr.bf16.mxu0 0
  %218 = vmatpush1.bf16.msra.mxu0 0
  %219 = vmatprep.subr.bf16.mxu0 0
  %220 = vmatpush1.bf16.msra.mxu0 0
  %221 = vmatprep.subr.bf16.mxu0 0
  %222 = vmatpush1.bf16.msra.mxu0 %v157
  %223 = vmatprep.subr.bf16.mxu0 0
  %224 = vmatpush1.bf16.msra.mxu0 %v156
  %225 = vmatprep.subr.bf16.mxu0 0
  %226 = vmatpush2.bf16.msra.mxu0 0
  %227 = vmatprep.subr.bf16.mxu0 0
  %228 = vmatpush2.bf16.msra.mxu0 0
  %229 = vmatprep.subr.bf16.mxu0 0
  %230 = vmatpush2.bf16.msra.mxu0 0
  %231 = vmatprep.subr.bf16.mxu0 0
  %232 = vmatpush2.bf16.msra.mxu0 0
  %233 = vmatprep.subr.bf16.mxu0 0
  %234 = vmatpush2.bf16.msra.mxu0 0
  %235 = vmatprep.subr.bf16.mxu0 0
  %236 = vmatpush2.bf16.msra.mxu0 0
  %237 = vmatprep.subr.bf16.mxu0 0
  %238 = vmatpush2.bf16.msra.mxu0 0
  %239 = vmatprep.subr.bf16.mxu0 0
  %240 = vmatpush2.bf16.msra.mxu0 0
  %241 = vmatprep.mubr.bf16.mxu0 0
  %242 = vmatmul.mubr.bf16.gmra.mxu0 %v162
  %v243 = vpop.f32.mrf.mxu0
  %v244 = vadd.f32 %v67, %v243
  %v245 = vpop.f32.mrf.mxu0
  %v246 = vpop.f32.mrf.mxu0
  %v247 = vadd.f32 %v67, %v246
  %v248 = vpop.f32.mrf.mxu0
  %249 = vmatprep.mubr.bf16.mxu0 0
  %250 = vmatmul.mubr.bf16.gmra.mxu0 %v165
  %v251 = vpop.f32.mrf.mxu0
  %v252 = vadd.f32 %v67, %v251
  %v253 = vpop.f32.mrf.mxu0
  %v254 = vpop.f32.mrf.mxu0
  %v255 = vadd.f32 %v67, %v254
  %v256 = vpop.f32.mrf.mxu0
  %257 = vmatprep.mubr.bf16.mxu0 0
  %258 = vmatmul.mubr.bf16.gmra.mxu0 %v168
  %v259 = vpop.f32.mrf.mxu0
  %v260 = vadd.f32 %v67, %v259
  %v261 = vpop.f32.mrf.mxu0
  %v262 = vpop.f32.mrf.mxu0
  %v263 = vadd.f32 %v67, %v262
  %v264 = vpop.f32.mrf.mxu0
  %265 = vmatprep.mubr.bf16.mxu0 0
  %266 = vmatmul.mubr.bf16.gmra.mxu0 %v171
  %v267 = vpop.f32.mrf.mxu0
  %v268 = vadd.f32 %v67, %v267
  %v269 = vpop.f32.mrf.mxu0
  %v270 = vpop.f32.mrf.mxu0
  %v271 = vadd.f32 %v67, %v270
  %v272 = vpop.f32.mrf.mxu0
  %273 = vmatprep.mubr.bf16.mxu0 0
  %274 = vmatmul.mubr.bf16.gmra.mxu0 %v174
  %v275 = vpop.f32.mrf.mxu0
  %v276 = vadd.f32 %v67, %v275
  %v277 = vpop.f32.mrf.mxu0
  %v278 = vpop.f32.mrf.mxu0
  %v279 = vadd.f32 %v67, %v278
  %v280 = vpop.f32.mrf.mxu0
  %281 = vmatprep.mubr.bf16.mxu0 0
  %282 = vmatmul.mubr.bf16.gmra.mxu0 %v177
  %v283 = vpop.f32.mrf.mxu0
  %v284 = vadd.f32 %v67, %v283
  %v285 = vpop.f32.mrf.mxu0
  %v286 = vpop.f32.mrf.mxu0
  %v287 = vadd.f32 %v67, %v286
  %v288 = vpop.f32.mrf.mxu0
  %289 = vmatprep.mubr.bf16.mxu0 0
  %290 = vmatmul.mubr.bf16.gmra.mxu0 %v180
  %v291 = vpop.f32.mrf.mxu0
  %v292 = vadd.f32 %v67, %v291
  %v293 = vpop.f32.mrf.mxu0
  %v294 = vpop.f32.mrf.mxu0
  %v295 = vadd.f32 %v67, %v294
  %v296 = vpop.f32.mrf.mxu0
  %297 = vmatprep.mubr.bf16.mxu0 0
  %298 = vmatmul.mubr.bf16.gmra.mxu0 %v183
  %v299 = vpop.f32.mrf.mxu0
  %v300 = vadd.f32 %v67, %v299
  %v301 = vpop.f32.mrf.mxu0
  %v302 = vpop.f32.mrf.mxu0
  %v303 = vadd.f32 %v67, %v302
  %v304 = vpop.f32.mrf.mxu0
  %305 = vmatprep.mubr.bf16.mxu0 0
  %306 = vmatmul.mubr.bf16.gmra.mxu0 %v186
  %v307 = vpop.f32.mrf.mxu0
  %v308 = vadd.f32 %v67, %v307
  %v309 = vpop.f32.mrf.mxu0
  %v310 = vpop.f32.mrf.mxu0
  %v311 = vadd.f32 %v67, %v310
  %v312 = vpop.f32.mrf.mxu0
  %313 = vmatprep.mubr.bf16.mxu0 0
  %314 = vmatmul.mubr.bf16.gmra.mxu0 %v189
  %v315 = vpop.f32.mrf.mxu0
  %v316 = vadd.f32 %v67, %v315
  %v317 = vpop.f32.mrf.mxu0
  %v318 = vpop.f32.mrf.mxu0
  %v319 = vadd.f32 %v67, %v318
  %v320 = vpop.f32.mrf.mxu0
  %321 = vmatprep.mubr.bf16.mxu0 0
  %322 = vmatmul.mubr.bf16.gmra.mxu0 %v192
  %v323 = vpop.f32.mrf.mxu0
  %v324 = vadd.f32 %v67, %v323
  %v325 = vpop.f32.mrf.mxu0
  %v326 = vpop.f32.mrf.mxu0
  %v327 = vadd.f32 %v67, %v326
  %v328 = vpop.f32.mrf.mxu0
  %329 = vmatprep.mubr.bf16.mxu0 0
  %330 = vmatmul.mubr.bf16.gmra.mxu0 %v195
  %v331 = vpop.f32.mrf.mxu0
  %v332 = vadd.f32 %v67, %v331
  %v333 = vpop.f32.mrf.mxu0
  %v334 = vpop.f32.mrf.mxu0
  %v335 = vadd.f32 %v67, %v334
  %v336 = vpop.f32.mrf.mxu0
  %337 = vmatprep.mubr.bf16.mxu0 0
  %338 = vmatmul.mubr.bf16.gmra.mxu0 %v198
  %v339 = vpop.f32.mrf.mxu0
  %v340 = vadd.f32 %v67, %v339
  %v341 = vpop.f32.mrf.mxu0
  %v342 = vpop.f32.mrf.mxu0
  %v343 = vadd.f32 %v67, %v342
  %v344 = vpop.f32.mrf.mxu0
  %345 = vmatprep.mubr.bf16.mxu0 0
  %346 = vmatmul.mubr.bf16.gmra.mxu0 %v201
  %v347 = vpop.f32.mrf.mxu0
  %v348 = vadd.f32 %v67, %v347
  %v349 = vpop.f32.mrf.mxu0
  %v350 = vpop.f32.mrf.mxu0
  %v351 = vadd.f32 %v67, %v350
  %v352 = vpop.f32.mrf.mxu0
  %353 = vmatprep.mubr.bf16.mxu0 0
  %354 = vmatmul.mubr.bf16.gmra.mxu0 %v204
  %v355 = vpop.f32.mrf.mxu0
  %v356 = vadd.f32 %v67, %v355
  %v357 = vpop.f32.mrf.mxu0
  %v358 = vpop.f32.mrf.mxu0
  %v359 = vadd.f32 %v67, %v358
  %v360 = vpop.f32.mrf.mxu0
  %361 = vmatprep.mubr.bf16.mxu0 0
  %362 = vmatmul.mubr.bf16.gmra.mxu0 %v207
  %v363 = vpop.f32.mrf.mxu0
  %v364 = vadd.f32 %v67, %v363
  %v365 = vpop.f32.mrf.mxu0
  %v366 = vpop.f32.mrf.mxu0
  %v367 = vadd.f32 %v67, %v366
  %v368 = vpop.f32.mrf.mxu0
  %369 = vdwg.mxu0
  %v370 = vmax.f32 %v244, 0.0
  %v371 = vmax.f32 %v247, 0.0
  %v372 = vmax.f32 %v252, 0.0
  %v373 = vmax.f32 %v255, 0.0
  %v374 = vmax.f32 %v260, 0.0
  %v375 = vmax.f32 %v263, 0.0
  %v376 = vmax.f32 %v268, 0.0
  %v377 = vmax.f32 %v271, 0.0
  %v378 = vmax.f32 %v276, 0.0
  %v379 = vmax.f32 %v279, 0.0
  %v380 = vmax.f32 %v284, 0.0
  %v381 = vmax.f32 %v287, 0.0
  %v382 = vmax.f32 %v292, 0.0
  %v383 = vmax.f32 %v295, 0.0
  %v384 = vmax.f32 %v300, 0.0
  %v385 = vmax.f32 %v303, 0.0
  %v386 = vmax.f32 %v308, 0.0
  %v387 = vmax.f32 %v311, 0.0
  %v388 = vmax.f32 %v316, 0.0
  %v389 = vmax.f32 %v319, 0.0
  %v390 = vmax.f32 %v324, 0.0
  %v391 = vmax.f32 %v327, 0.0
  %v392 = vmax.f32 %v332, 0.0
  %v393 = vmax.f32 %v335, 0.0
  %v394 = vmax.f32 %v340, 0.0
  %v395 = vmax.f32 %v343, 0.0
  %v396 = vmax.f32 %v348, 0.0
  %v397 = vmax.f32 %v351, 0.0
  %v398 = vmax.f32 %v356, 0.0
  %v399 = vmax.f32 %v359, 0.0
  %v400 = vmax.f32 %v364, 0.0
  %v401 = vmax.f32 %v367, 0.0
  %v402 = vpack.c.bf16 %v371, %v370
  %v403 = vpack.c.bf16 %v373, %v372
  %v404 = vpack.c.bf16 %v375, %v374
  %v405 = vpack.c.bf16 %v377, %v376
  %v406 = vpack.c.bf16 %v379, %v378
  %v407 = vpack.c.bf16 %v381, %v380
  %v408 = vpack.c.bf16 %v383, %v382
  %v409 = vpack.c.bf16 %v385, %v384
  %v410 = vpack.c.bf16 %v387, %v386
  %v411 = vpack.c.bf16 %v389, %v388
  %v412 = vpack.c.bf16 %v391, %v390
  %v413 = vpack.c.bf16 %v393, %v392
  %v414 = vpack.c.bf16 %v395, %v394
  %v415 = vpack.c.bf16 %v397, %v396
  %v416 = vpack.c.bf16 %v399, %v398
  %v417 = vpack.c.bf16 %v401, %v400
  %v418 = vld [vmem:[%s2] sm:$0xf]
  %v419 = vld [vmem:[%s2 + $0x4] sm:$0xf]
  %v420 = vld [vmem:[%s2 + $0x8] sm:$0xf]
  %v421 = vld [vmem:[%s2 + $0xc] sm:$0xf]
  %v422 = vld [vmem:[%s2 + $0x10] sm:$0xf]
  %v423 = vld [vmem:[%s2 + $0x14] sm:$0xf]
  %v424 = vld [vmem:[%s2 + $0x18] sm:$0xf]
  %v425 = vld [vmem:[%s2 + $0x1c] sm:$0xf]
  %v426 = vld [vmem:[%s6 + $0x1] sm:$0x1]
  %v427 = vlaneseq
  %v428 = vshrl.u32 %v427, 7
  %v429 = vsub.s32 0, %v428
  %v430 = vrot.slane %v426, %v429
  %v439 = vunpack.c.l.b16 %v418
  %v440 = vunpack.c.l.b16 %v419
  %v441 = vunpack.c.l.b16 %v420
  %v442 = vunpack.c.l.b16 %v421
  %v443 = vunpack.c.l.b16 %v422
  %v444 = vunpack.c.l.b16 %v423
  %v445 = vunpack.c.l.b16 %v424
  %v446 = vunpack.c.l.b16 %v425
  %v447 = vpack.c.b16 %v440, %v439
  %v448 = vpack.c.b16 %v442, %v441
  %v449 = vpack.c.b16 %v444, %v443
  %v450 = vpack.c.b16 %v446, %v445
  %vm455 = vcmask 523264
  %v457 = vsel %vm455, %v402, 0
  %v460 = vsel %vm455, %v403, 0
  %v463 = vsel %vm455, %v404, 0
  %v466 = vsel %vm455, %v405, 0
  %v469 = vsel %vm455, %v406, 0
  %v472 = vsel %vm455, %v407, 0
  %v475 = vsel %vm455, %v408, 0
  %v478 = vsel %vm455, %v409, 0
  %v481 = vsel %vm455, %v410, 0
  %v484 = vsel %vm455, %v411, 0
  %v487 = vsel %vm455, %v412, 0
  %v490 = vsel %vm455, %v413, 0
  %v493 = vsel %vm455, %v414, 0
  %v496 = vsel %vm455, %v415, 0
  %v499 = vsel %vm455, %v416, 0
  %v502 = vsel %vm455, %v417, 0
  %504 = vmatprep.subr.bf16.mxu0 0
  %505 = vmatpush1.bf16.msra.mxu0 0
  %506 = vmatprep.subr.bf16.mxu0 0
  %507 = vmatpush1.bf16.msra.mxu0 0
  %508 = vmatprep.subr.bf16.mxu0 0
  %509 = vmatpush1.bf16.msra.mxu0 0
  %510 = vmatprep.subr.bf16.mxu0 0
  %511 = vmatpush1.bf16.msra.mxu0 0
  %512 = vmatprep.subr.bf16.mxu0 0
  %513 = vmatpush1.bf16.msra.mxu0 %v450
  %514 = vmatprep.subr.bf16.mxu0 0
  %515 = vmatpush1.bf16.msra.mxu0 %v449
  %516 = vmatprep.subr.bf16.mxu0 0
  %517 = vmatpush1.bf16.msra.mxu0 %v448
  %518 = vmatprep.subr.bf16.mxu0 0
  %519 = vmatpush1.bf16.msra.mxu0 %v447
  %520 = vmatprep.subr.bf16.mxu0 0
  %521 = vmatpush2.bf16.msra.mxu0 0
  %522 = vmatprep.subr.bf16.mxu0 0
  %523 = vmatpush2.bf16.msra.mxu0 0
  %524 = vmatprep.subr.bf16.mxu0 0
  %525 = vmatpush2.bf16.msra.mxu0 0
  %526 = vmatprep.subr.bf16.mxu0 0
  %527 = vmatpush2.bf16.msra.mxu0 0
  %528 = vmatprep.subr.bf16.mxu0 0
  %529 = vmatpush2.bf16.msra.mxu0 0
  %530 = vmatprep.subr.bf16.mxu0 0
  %531 = vmatpush2.bf16.msra.mxu0 0
  %532 = vmatprep.subr.bf16.mxu0 0
  %533 = vmatpush2.bf16.msra.mxu0 0
  %534 = vmatprep.subr.bf16.mxu0 0
  %535 = vmatpush2.bf16.msra.mxu0 0
  %536 = vmatprep.mubr.bf16.mxu0 0
  %537 = vmatmul.mubr.bf16.gmra.mxu0 %v457
  %v538 = vpop.f32.mrf.mxu0
  %v539 = vadd.f32 %v430, %v538
  %v540 = vpop.f32.mrf.mxu0
  %v541 = vpop.f32.mrf.mxu0
  %v542 = vadd.f32 %v430, %v541
  %v543 = vpop.f32.mrf.mxu0
  %544 = vmatprep.mubr.bf16.mxu0 0
  %545 = vmatmul.mubr.bf16.gmra.mxu0 %v460
  %v546 = vpop.f32.mrf.mxu0
  %v547 = vadd.f32 %v430, %v546
  %v548 = vpop.f32.mrf.mxu0
  %v549 = vpop.f32.mrf.mxu0
  %v550 = vadd.f32 %v430, %v549
  %v551 = vpop.f32.mrf.mxu0
  %552 = vmatprep.mubr.bf16.mxu0 0
  %553 = vmatmul.mubr.bf16.gmra.mxu0 %v463
  %v554 = vpop.f32.mrf.mxu0
  %v555 = vadd.f32 %v430, %v554
  %v556 = vpop.f32.mrf.mxu0
  %v557 = vpop.f32.mrf.mxu0
  %v558 = vadd.f32 %v430, %v557
  %v559 = vpop.f32.mrf.mxu0
  %560 = vmatprep.mubr.bf16.mxu0 0
  %561 = vmatmul.mubr.bf16.gmra.mxu0 %v466
  %v562 = vpop.f32.mrf.mxu0
  %v563 = vadd.f32 %v430, %v562
  %v564 = vpop.f32.mrf.mxu0
  %v565 = vpop.f32.mrf.mxu0
  %v566 = vadd.f32 %v430, %v565
  %v567 = vpop.f32.mrf.mxu0
  %568 = vmatprep.mubr.bf16.mxu0 0
  %569 = vmatmul.mubr.bf16.gmra.mxu0 %v469
  %v570 = vpop.f32.mrf.mxu0
  %v571 = vadd.f32 %v430, %v570
  %v572 = vpop.f32.mrf.mxu0
  %v573 = vpop.f32.mrf.mxu0
  %v574 = vadd.f32 %v430, %v573
  %v575 = vpop.f32.mrf.mxu0
  %576 = vmatprep.mubr.bf16.mxu0 0
  %577 = vmatmul.mubr.bf16.gmra.mxu0 %v472
  %v578 = vpop.f32.mrf.mxu0
  %v579 = vadd.f32 %v430, %v578
  %v580 = vpop.f32.mrf.mxu0
  %v581 = vpop.f32.mrf.mxu0
  %v582 = vadd.f32 %v430, %v581
  %v583 = vpop.f32.mrf.mxu0
  %584 = vmatprep.mubr.bf16.mxu0 0
  %585 = vmatmul.mubr.bf16.gmra.mxu0 %v475
  %v586 = vpop.f32.mrf.mxu0
  %v587 = vadd.f32 %v430, %v586
  %v588 = vpop.f32.mrf.mxu0
  %v589 = vpop.f32.mrf.mxu0
  %v590 = vadd.f32 %v430, %v589
  %v591 = vpop.f32.mrf.mxu0
  %592 = vmatprep.mubr.bf16.mxu0 0
  %593 = vmatmul.mubr.bf16.gmra.mxu0 %v478
  %v594 = vpop.f32.mrf.mxu0
  %v595 = vadd.f32 %v430, %v594
  %v596 = vpop.f32.mrf.mxu0
  %v597 = vpop.f32.mrf.mxu0
  %v598 = vadd.f32 %v430, %v597
  %v599 = vpop.f32.mrf.mxu0
  %600 = vmatprep.mubr.bf16.mxu0 0
  %601 = vmatmul.mubr.bf16.gmra.mxu0 %v481
  %v602 = vpop.f32.mrf.mxu0
  %v603 = vadd.f32 %v430, %v602
  %v604 = vpop.f32.mrf.mxu0
  %v605 = vpop.f32.mrf.mxu0
  %v606 = vadd.f32 %v430, %v605
  %v607 = vpop.f32.mrf.mxu0
  %608 = vmatprep.mubr.bf16.mxu0 0
  %609 = vmatmul.mubr.bf16.gmra.mxu0 %v484
  %v610 = vpop.f32.mrf.mxu0
  %v611 = vadd.f32 %v430, %v610
  %v612 = vpop.f32.mrf.mxu0
  %v613 = vpop.f32.mrf.mxu0
  %v614 = vadd.f32 %v430, %v613
  %v615 = vpop.f32.mrf.mxu0
  %616 = vmatprep.mubr.bf16.mxu0 0
  %617 = vmatmul.mubr.bf16.gmra.mxu0 %v487
  %v618 = vpop.f32.mrf.mxu0
  %v619 = vadd.f32 %v430, %v618
  %v620 = vpop.f32.mrf.mxu0
  %v621 = vpop.f32.mrf.mxu0
  %v622 = vadd.f32 %v430, %v621
  %v623 = vpop.f32.mrf.mxu0
  %624 = vmatprep.mubr.bf16.mxu0 0
  %625 = vmatmul.mubr.bf16.gmra.mxu0 %v490
  %v626 = vpop.f32.mrf.mxu0
  %v627 = vadd.f32 %v430, %v626
  %v628 = vpop.f32.mrf.mxu0
  %v629 = vpop.f32.mrf.mxu0
  %v630 = vadd.f32 %v430, %v629
  %v631 = vpop.f32.mrf.mxu0
  %632 = vmatprep.mubr.bf16.mxu0 0
  %633 = vmatmul.mubr.bf16.gmra.mxu0 %v493
  %v634 = vpop.f32.mrf.mxu0
  %v635 = vadd.f32 %v430, %v634
  %v636 = vpop.f32.mrf.mxu0
  %v637 = vpop.f32.mrf.mxu0
  %v638 = vadd.f32 %v430, %v637
  %v639 = vpop.f32.mrf.mxu0
  %640 = vmatprep.mubr.bf16.mxu0 0
  %641 = vmatmul.mubr.bf16.gmra.mxu0 %v496
  %v642 = vpop.f32.mrf.mxu0
  %v643 = vadd.f32 %v430, %v642
  %v644 = vpop.f32.mrf.mxu0
  %v645 = vpop.f32.mrf.mxu0
  %v646 = vadd.f32 %v430, %v645
  %v647 = vpop.f32.mrf.mxu0
  %648 = vmatprep.mubr.bf16.mxu0 0
  %649 = vmatmul.mubr.bf16.gmra.mxu0 %v499
  %v650 = vpop.f32.mrf.mxu0
  %v651 = vadd.f32 %v430, %v650
  %v652 = vpop.f32.mrf.mxu0
  %v653 = vpop.f32.mrf.mxu0
  %v654 = vadd.f32 %v430, %v653
  %v655 = vpop.f32.mrf.mxu0
  %656 = vmatprep.mubr.bf16.mxu0 0
  %657 = vmatmul.mubr.bf16.gmra.mxu0 %v502
  %v658 = vpop.f32.mrf.mxu0
  %v659 = vadd.f32 %v430, %v658
  %v660 = vpop.f32.mrf.mxu0
  %v661 = vpop.f32.mrf.mxu0
  %v662 = vadd.f32 %v430, %v661
  %v663 = vpop.f32.mrf.mxu0
  %664 = vdwg.mxu0
  %v665 = vmax.f32 %v539, 0.0
  %v666 = vmax.f32 %v542, 0.0
  %v667 = vmax.f32 %v547, 0.0
  %v668 = vmax.f32 %v550, 0.0
  %v669 = vmax.f32 %v555, 0.0
  %v670 = vmax.f32 %v558, 0.0
  %v671 = vmax.f32 %v563, 0.0
  %v672 = vmax.f32 %v566, 0.0
  %v673 = vmax.f32 %v571, 0.0
  %v674 = vmax.f32 %v574, 0.0
  %v675 = vmax.f32 %v579, 0.0
  %v676 = vmax.f32 %v582, 0.0
  %v677 = vmax.f32 %v587, 0.0
  %v678 = vmax.f32 %v590, 0.0
  %v679 = vmax.f32 %v595, 0.0
  %v680 = vmax.f32 %v598, 0.0
  %v681 = vmax.f32 %v603, 0.0
  %v682 = vmax.f32 %v606, 0.0
  %v683 = vmax.f32 %v611, 0.0
  %v684 = vmax.f32 %v614, 0.0
  %v685 = vmax.f32 %v619, 0.0
  %v686 = vmax.f32 %v622, 0.0
  %v687 = vmax.f32 %v627, 0.0
  %v688 = vmax.f32 %v630, 0.0
  %v689 = vmax.f32 %v635, 0.0
  %v690 = vmax.f32 %v638, 0.0
  %v691 = vmax.f32 %v643, 0.0
  %v692 = vmax.f32 %v646, 0.0
  %v693 = vmax.f32 %v651, 0.0
  %v694 = vmax.f32 %v654, 0.0
  %v695 = vmax.f32 %v659, 0.0
  %v696 = vmax.f32 %v662, 0.0
  %v697 = vpack.c.bf16 %v666, %v665
  %v698 = vpack.c.bf16 %v668, %v667
  %v699 = vpack.c.bf16 %v670, %v669
  %v700 = vpack.c.bf16 %v672, %v671
  %v701 = vpack.c.bf16 %v674, %v673
  %v702 = vpack.c.bf16 %v676, %v675
  %v703 = vpack.c.bf16 %v678, %v677
  %v704 = vpack.c.bf16 %v680, %v679
  %v705 = vpack.c.bf16 %v682, %v681
  %v706 = vpack.c.bf16 %v684, %v683
  %v707 = vpack.c.bf16 %v686, %v685
  %v708 = vpack.c.bf16 %v688, %v687
  %v709 = vpack.c.bf16 %v690, %v689
  %v710 = vpack.c.bf16 %v692, %v691
  %v711 = vpack.c.bf16 %v694, %v693
  %v712 = vpack.c.bf16 %v696, %v695
  %v713 = vld [vmem:[%s3] sm:$0xf]
  %v714 = vld [vmem:[%s3 + $0x4] sm:$0xf]
  %v715 = vld [vmem:[%s3 + $0x8] sm:$0xf]
  %v716 = vld [vmem:[%s3 + $0xc] sm:$0xf]
  %v717 = vld [vmem:[%s3 + $0x10] sm:$0xf]
  %v718 = vld [vmem:[%s3 + $0x14] sm:$0xf]
  %v719 = vld [vmem:[%s3 + $0x18] sm:$0xf]
  %v720 = vld [vmem:[%s3 + $0x1c] sm:$0xf]
  %v721 = vld [vmem:[%s6 + $0x2] sm:$0x1]
  %v722 = vlaneseq
  %v723 = vshrl.u32 %v722, 7
  %v724 = vsub.s32 0, %v723
  %v725 = vrot.slane %v721, %v724
  %v734 = vunpack.c.l.b16 %v713
  %v735 = vunpack.c.l.b16 %v714
  %v736 = vunpack.c.l.b16 %v715
  %v737 = vunpack.c.l.b16 %v716
  %v738 = vunpack.c.l.b16 %v717
  %v739 = vunpack.c.l.b16 %v718
  %v740 = vunpack.c.l.b16 %v719
  %v741 = vunpack.c.l.b16 %v720
  %v742 = vpack.c.b16 %v735, %v734
  %v743 = vpack.c.b16 %v737, %v736
  %v744 = vpack.c.b16 %v739, %v738
  %v745 = vpack.c.b16 %v741, %v740
  %v751 = vsel %vm455, %v697, 0
  %v754 = vsel %vm455, %v698, 0
  %v757 = vsel %vm455, %v699, 0
  %v760 = vsel %vm455, %v700, 0
  %v763 = vsel %vm455, %v701, 0
  %v766 = vsel %vm455, %v702, 0
  %v769 = vsel %vm455, %v703, 0
  %v772 = vsel %vm455, %v704, 0
  %v775 = vsel %vm455, %v705, 0
  %v778 = vsel %vm455, %v706, 0
  %v781 = vsel %vm455, %v707, 0
  %v784 = vsel %vm455, %v708, 0
  %v787 = vsel %vm455, %v709, 0
  %v790 = vsel %vm455, %v710, 0
  %v793 = vsel %vm455, %v711, 0
  %v796 = vsel %vm455, %v712, 0
  %798 = vmatprep.subr.bf16.mxu0 0
  %799 = vmatpush1.bf16.msra.mxu0 0
  %800 = vmatprep.subr.bf16.mxu0 0
  %801 = vmatpush1.bf16.msra.mxu0 0
  %802 = vmatprep.subr.bf16.mxu0 0
  %803 = vmatpush1.bf16.msra.mxu0 0
  %804 = vmatprep.subr.bf16.mxu0 0
  %805 = vmatpush1.bf16.msra.mxu0 0
  %806 = vmatprep.subr.bf16.mxu0 0
  %807 = vmatpush1.bf16.msra.mxu0 %v745
  %808 = vmatprep.subr.bf16.mxu0 0
  %809 = vmatpush1.bf16.msra.mxu0 %v744
  %810 = vmatprep.subr.bf16.mxu0 0
  %811 = vmatpush1.bf16.msra.mxu0 %v743
  %812 = vmatprep.subr.bf16.mxu0 0
  %813 = vmatpush1.bf16.msra.mxu0 %v742
  %814 = vmatprep.subr.bf16.mxu0 0
  %815 = vmatpush2.bf16.msra.mxu0 0
  %816 = vmatprep.subr.bf16.mxu0 0
  %817 = vmatpush2.bf16.msra.mxu0 0
  %818 = vmatprep.subr.bf16.mxu0 0
  %819 = vmatpush2.bf16.msra.mxu0 0
  %820 = vmatprep.subr.bf16.mxu0 0
  %821 = vmatpush2.bf16.msra.mxu0 0
  %822 = vmatprep.subr.bf16.mxu0 0
  %823 = vmatpush2.bf16.msra.mxu0 0
  %824 = vmatprep.subr.bf16.mxu0 0
  %825 = vmatpush2.bf16.msra.mxu0 0
  %826 = vmatprep.subr.bf16.mxu0 0
  %827 = vmatpush2.bf16.msra.mxu0 0
  %828 = vmatprep.subr.bf16.mxu0 0
  %829 = vmatpush2.bf16.msra.mxu0 0
  %830 = vmatprep.mubr.bf16.mxu0 0
  %831 = vmatmul.mubr.bf16.gmra.mxu0 %v751
  %v832 = vpop.f32.mrf.mxu0
  %v833 = vadd.f32 %v725, %v832
  %v834 = vpop.f32.mrf.mxu0
  %v835 = vpop.f32.mrf.mxu0
  %v836 = vadd.f32 %v725, %v835
  %v837 = vpop.f32.mrf.mxu0
  %838 = vmatprep.mubr.bf16.mxu0 0
  %839 = vmatmul.mubr.bf16.gmra.mxu0 %v754
  %v840 = vpop.f32.mrf.mxu0
  %v841 = vadd.f32 %v725, %v840
  %v842 = vpop.f32.mrf.mxu0
  %v843 = vpop.f32.mrf.mxu0
  %v844 = vadd.f32 %v725, %v843
  %v845 = vpop.f32.mrf.mxu0
  %846 = vmatprep.mubr.bf16.mxu0 0
  %847 = vmatmul.mubr.bf16.gmra.mxu0 %v757
  %v848 = vpop.f32.mrf.mxu0
  %v849 = vadd.f32 %v725, %v848
  %v850 = vpop.f32.mrf.mxu0
  %v851 = vpop.f32.mrf.mxu0
  %v852 = vadd.f32 %v725, %v851
  %v853 = vpop.f32.mrf.mxu0
  %854 = vmatprep.mubr.bf16.mxu0 0
  %855 = vmatmul.mubr.bf16.gmra.mxu0 %v760
  %v856 = vpop.f32.mrf.mxu0
  %v857 = vadd.f32 %v725, %v856
  %v858 = vpop.f32.mrf.mxu0
  %v859 = vpop.f32.mrf.mxu0
  %v860 = vadd.f32 %v725, %v859
  %v861 = vpop.f32.mrf.mxu0
  %862 = vmatprep.mubr.bf16.mxu0 0
  %863 = vmatmul.mubr.bf16.gmra.mxu0 %v763
  %v864 = vpop.f32.mrf.mxu0
  %v865 = vadd.f32 %v725, %v864
  %v866 = vpop.f32.mrf.mxu0
  %v867 = vpop.f32.mrf.mxu0
  %v868 = vadd.f32 %v725, %v867
  %v869 = vpop.f32.mrf.mxu0
  %870 = vmatprep.mubr.bf16.mxu0 0
  %871 = vmatmul.mubr.bf16.gmra.mxu0 %v766
  %v872 = vpop.f32.mrf.mxu0
  %v873 = vadd.f32 %v725, %v872
  %v874 = vpop.f32.mrf.mxu0
  %v875 = vpop.f32.mrf.mxu0
  %v876 = vadd.f32 %v725, %v875
  %v877 = vpop.f32.mrf.mxu0
  %878 = vmatprep.mubr.bf16.mxu0 0
  %879 = vmatmul.mubr.bf16.gmra.mxu0 %v769
  %v880 = vpop.f32.mrf.mxu0
  %v881 = vadd.f32 %v725, %v880
  %v882 = vpop.f32.mrf.mxu0
  %v883 = vpop.f32.mrf.mxu0
  %v884 = vadd.f32 %v725, %v883
  %v885 = vpop.f32.mrf.mxu0
  %886 = vmatprep.mubr.bf16.mxu0 0
  %887 = vmatmul.mubr.bf16.gmra.mxu0 %v772
  %v888 = vpop.f32.mrf.mxu0
  %v889 = vadd.f32 %v725, %v888
  %v890 = vpop.f32.mrf.mxu0
  %v891 = vpop.f32.mrf.mxu0
  %v892 = vadd.f32 %v725, %v891
  %v893 = vpop.f32.mrf.mxu0
  %894 = vmatprep.mubr.bf16.mxu0 0
  %895 = vmatmul.mubr.bf16.gmra.mxu0 %v775
  %v896 = vpop.f32.mrf.mxu0
  %v897 = vadd.f32 %v725, %v896
  %v898 = vpop.f32.mrf.mxu0
  %v899 = vpop.f32.mrf.mxu0
  %v900 = vadd.f32 %v725, %v899
  %v901 = vpop.f32.mrf.mxu0
  %902 = vmatprep.mubr.bf16.mxu0 0
  %903 = vmatmul.mubr.bf16.gmra.mxu0 %v778
  %v904 = vpop.f32.mrf.mxu0
  %v905 = vadd.f32 %v725, %v904
  %v906 = vpop.f32.mrf.mxu0
  %v907 = vpop.f32.mrf.mxu0
  %v908 = vadd.f32 %v725, %v907
  %v909 = vpop.f32.mrf.mxu0
  %910 = vmatprep.mubr.bf16.mxu0 0
  %911 = vmatmul.mubr.bf16.gmra.mxu0 %v781
  %v912 = vpop.f32.mrf.mxu0
  %v913 = vadd.f32 %v725, %v912
  %v914 = vpop.f32.mrf.mxu0
  %v915 = vpop.f32.mrf.mxu0
  %v916 = vadd.f32 %v725, %v915
  %v917 = vpop.f32.mrf.mxu0
  %918 = vmatprep.mubr.bf16.mxu0 0
  %919 = vmatmul.mubr.bf16.gmra.mxu0 %v784
  %v920 = vpop.f32.mrf.mxu0
  %v921 = vadd.f32 %v725, %v920
  %v922 = vpop.f32.mrf.mxu0
  %v923 = vpop.f32.mrf.mxu0
  %v924 = vadd.f32 %v725, %v923
  %v925 = vpop.f32.mrf.mxu0
  %926 = vmatprep.mubr.bf16.mxu0 0
  %927 = vmatmul.mubr.bf16.gmra.mxu0 %v787
  %v928 = vpop.f32.mrf.mxu0
  %v929 = vadd.f32 %v725, %v928
  %v930 = vpop.f32.mrf.mxu0
  %v931 = vpop.f32.mrf.mxu0
  %v932 = vadd.f32 %v725, %v931
  %v933 = vpop.f32.mrf.mxu0
  %934 = vmatprep.mubr.bf16.mxu0 0
  %935 = vmatmul.mubr.bf16.gmra.mxu0 %v790
  %v936 = vpop.f32.mrf.mxu0
  %v937 = vadd.f32 %v725, %v936
  %v938 = vpop.f32.mrf.mxu0
  %v939 = vpop.f32.mrf.mxu0
  %v940 = vadd.f32 %v725, %v939
  %v941 = vpop.f32.mrf.mxu0
  %942 = vmatprep.mubr.bf16.mxu0 0
  %943 = vmatmul.mubr.bf16.gmra.mxu0 %v793
  %v944 = vpop.f32.mrf.mxu0
  %v945 = vadd.f32 %v725, %v944
  %v946 = vpop.f32.mrf.mxu0
  %v947 = vpop.f32.mrf.mxu0
  %v948 = vadd.f32 %v725, %v947
  %v949 = vpop.f32.mrf.mxu0
  %950 = vmatprep.mubr.bf16.mxu0 0
  %951 = vmatmul.mubr.bf16.gmra.mxu0 %v796
  %v952 = vpop.f32.mrf.mxu0
  %v953 = vadd.f32 %v725, %v952
  %v954 = vpop.f32.mrf.mxu0
  %v955 = vpop.f32.mrf.mxu0
  %v956 = vadd.f32 %v725, %v955
  %v957 = vpop.f32.mrf.mxu0
  %958 = vdwg.mxu0
  %v959 = vmax.f32 %v833, 0.0
  %v960 = vmax.f32 %v836, 0.0
  %v961 = vmax.f32 %v841, 0.0
  %v962 = vmax.f32 %v844, 0.0
  %v963 = vmax.f32 %v849, 0.0
  %v964 = vmax.f32 %v852, 0.0
  %v965 = vmax.f32 %v857, 0.0
  %v966 = vmax.f32 %v860, 0.0
  %v967 = vmax.f32 %v865, 0.0
  %v968 = vmax.f32 %v868, 0.0
  %v969 = vmax.f32 %v873, 0.0
  %v970 = vmax.f32 %v876, 0.0
  %v971 = vmax.f32 %v881, 0.0
  %v972 = vmax.f32 %v884, 0.0
  %v973 = vmax.f32 %v889, 0.0
  %v974 = vmax.f32 %v892, 0.0
  %v975 = vmax.f32 %v897, 0.0
  %v976 = vmax.f32 %v900, 0.0
  %v977 = vmax.f32 %v905, 0.0
  %v978 = vmax.f32 %v908, 0.0
  %v979 = vmax.f32 %v913, 0.0
  %v980 = vmax.f32 %v916, 0.0
  %v981 = vmax.f32 %v921, 0.0
  %v982 = vmax.f32 %v924, 0.0
  %v983 = vmax.f32 %v929, 0.0
  %v984 = vmax.f32 %v932, 0.0
  %v985 = vmax.f32 %v937, 0.0
  %v986 = vmax.f32 %v940, 0.0
  %v987 = vmax.f32 %v945, 0.0
  %v988 = vmax.f32 %v948, 0.0
  %v989 = vmax.f32 %v953, 0.0
  %v990 = vmax.f32 %v956, 0.0
  %v991 = vpack.c.bf16 %v960, %v959
  %v992 = vpack.c.bf16 %v962, %v961
  %v993 = vpack.c.bf16 %v964, %v963
  %v994 = vpack.c.bf16 %v966, %v965
  %v995 = vpack.c.bf16 %v968, %v967
  %v996 = vpack.c.bf16 %v970, %v969
  %v997 = vpack.c.bf16 %v972, %v971
  %v998 = vpack.c.bf16 %v974, %v973
  %v999 = vpack.c.bf16 %v976, %v975
  %v1000 = vpack.c.bf16 %v978, %v977
  %v1001 = vpack.c.bf16 %v980, %v979
  %v1002 = vpack.c.bf16 %v982, %v981
  %v1003 = vpack.c.bf16 %v984, %v983
  %v1004 = vpack.c.bf16 %v986, %v985
  %v1005 = vpack.c.bf16 %v988, %v987
  %v1006 = vpack.c.bf16 %v990, %v989
  %v1007 = vld [vmem:[%s4] sm:$0xf]
  %v1008 = vld [vmem:[%s4 + $0x4] sm:$0xf]
  %v1009 = vld [vmem:[%s4 + $0x8] sm:$0xf]
  %v1010 = vld [vmem:[%s4 + $0xc] sm:$0xf]
  %v1011 = vld [vmem:[%s4 + $0x10] sm:$0xf]
  %v1012 = vld [vmem:[%s4 + $0x14] sm:$0xf]
  %v1013 = vld [vmem:[%s4 + $0x18] sm:$0xf]
  %v1014 = vld [vmem:[%s4 + $0x1c] sm:$0xf]
  %v1015 = vld [vmem:[%s6 + $0x3] sm:$0x1]
  %v1016 = vlaneseq
  %v1017 = vshrl.u32 %v1016, 7
  %v1018 = vsub.s32 0, %v1017
  %v1019 = vrot.slane %v1015, %v1018
  %v1028 = vunpack.c.l.b16 %v1007
  %v1029 = vunpack.c.l.b16 %v1008
  %v1030 = vunpack.c.l.b16 %v1009
  %v1031 = vunpack.c.l.b16 %v1010
  %v1032 = vunpack.c.l.b16 %v1011
  %v1033 = vunpack.c.l.b16 %v1012
  %v1034 = vunpack.c.l.b16 %v1013
  %v1035 = vunpack.c.l.b16 %v1014
  %v1036 = vpack.c.b16 %v1029, %v1028
  %v1037 = vpack.c.b16 %v1031, %v1030
  %v1038 = vpack.c.b16 %v1033, %v1032
  %v1039 = vpack.c.b16 %v1035, %v1034
  %v1045 = vsel %vm455, %v991, 0
  %v1048 = vsel %vm455, %v992, 0
  %v1051 = vsel %vm455, %v993, 0
  %v1054 = vsel %vm455, %v994, 0
  %v1057 = vsel %vm455, %v995, 0
  %v1060 = vsel %vm455, %v996, 0
  %v1063 = vsel %vm455, %v997, 0
  %v1066 = vsel %vm455, %v998, 0
  %v1069 = vsel %vm455, %v999, 0
  %v1072 = vsel %vm455, %v1000, 0
  %v1075 = vsel %vm455, %v1001, 0
  %v1078 = vsel %vm455, %v1002, 0
  %v1081 = vsel %vm455, %v1003, 0
  %v1084 = vsel %vm455, %v1004, 0
  %v1087 = vsel %vm455, %v1005, 0
  %v1090 = vsel %vm455, %v1006, 0
  %1092 = vmatprep.subr.bf16.mxu0 0
  %1093 = vmatpush1.bf16.msra.mxu0 0
  %1094 = vmatprep.subr.bf16.mxu0 0
  %1095 = vmatpush1.bf16.msra.mxu0 0
  %1096 = vmatprep.subr.bf16.mxu0 0
  %1097 = vmatpush1.bf16.msra.mxu0 0
  %1098 = vmatprep.subr.bf16.mxu0 0
  %1099 = vmatpush1.bf16.msra.mxu0 0
  %1100 = vmatprep.subr.bf16.mxu0 0
  %1101 = vmatpush1.bf16.msra.mxu0 %v1039
  %1102 = vmatprep.subr.bf16.mxu0 0
  %1103 = vmatpush1.bf16.msra.mxu0 %v1038
  %1104 = vmatprep.subr.bf16.mxu0 0
  %1105 = vmatpush1.bf16.msra.mxu0 %v1037
  %1106 = vmatprep.subr.bf16.mxu0 0
  %1107 = vmatpush1.bf16.msra.mxu0 %v1036
  %1108 = vmatprep.subr.bf16.mxu0 0
  %1109 = vmatpush2.bf16.msra.mxu0 0
  %1110 = vmatprep.subr.bf16.mxu0 0
  %1111 = vmatpush2.bf16.msra.mxu0 0
  %1112 = vmatprep.subr.bf16.mxu0 0
  %1113 = vmatpush2.bf16.msra.mxu0 0
  %1114 = vmatprep.subr.bf16.mxu0 0
  %1115 = vmatpush2.bf16.msra.mxu0 0
  %1116 = vmatprep.subr.bf16.mxu0 0
  %1117 = vmatpush2.bf16.msra.mxu0 0
  %1118 = vmatprep.subr.bf16.mxu0 0
  %1119 = vmatpush2.bf16.msra.mxu0 0
  %1120 = vmatprep.subr.bf16.mxu0 0
  %1121 = vmatpush2.bf16.msra.mxu0 0
  %1122 = vmatprep.subr.bf16.mxu0 0
  %1123 = vmatpush2.bf16.msra.mxu0 0
  %1124 = vmatprep.mubr.bf16.mxu0 0
  %1125 = vmatmul.mubr.bf16.gmra.mxu0 %v1045
  %v1126 = vpop.f32.mrf.mxu0
  %v1127 = vadd.f32 %v1019, %v1126
  %v1128 = vpop.f32.mrf.mxu0
  %v1129 = vpop.f32.mrf.mxu0
  %v1130 = vadd.f32 %v1019, %v1129
  %v1131 = vpop.f32.mrf.mxu0
  %1132 = vmatprep.mubr.bf16.mxu0 0
  %1133 = vmatmul.mubr.bf16.gmra.mxu0 %v1048
  %v1134 = vpop.f32.mrf.mxu0
  %v1135 = vadd.f32 %v1019, %v1134
  %v1136 = vpop.f32.mrf.mxu0
  %v1137 = vpop.f32.mrf.mxu0
  %v1138 = vadd.f32 %v1019, %v1137
  %v1139 = vpop.f32.mrf.mxu0
  %1140 = vmatprep.mubr.bf16.mxu0 0
  %1141 = vmatmul.mubr.bf16.gmra.mxu0 %v1051
  %v1142 = vpop.f32.mrf.mxu0
  %v1143 = vadd.f32 %v1019, %v1142
  %v1144 = vpop.f32.mrf.mxu0
  %v1145 = vpop.f32.mrf.mxu0
  %v1146 = vadd.f32 %v1019, %v1145
  %v1147 = vpop.f32.mrf.mxu0
  %1148 = vmatprep.mubr.bf16.mxu0 0
  %1149 = vmatmul.mubr.bf16.gmra.mxu0 %v1054
  %v1150 = vpop.f32.mrf.mxu0
  %v1151 = vadd.f32 %v1019, %v1150
  %v1152 = vpop.f32.mrf.mxu0
  %v1153 = vpop.f32.mrf.mxu0
  %v1154 = vadd.f32 %v1019, %v1153
  %v1155 = vpop.f32.mrf.mxu0
  %1156 = vmatprep.mubr.bf16.mxu0 0
  %1157 = vmatmul.mubr.bf16.gmra.mxu0 %v1057
  %v1158 = vpop.f32.mrf.mxu0
  %v1159 = vadd.f32 %v1019, %v1158
  %v1160 = vpop.f32.mrf.mxu0
  %v1161 = vpop.f32.mrf.mxu0
  %v1162 = vadd.f32 %v1019, %v1161
  %v1163 = vpop.f32.mrf.mxu0
  %1164 = vmatprep.mubr.bf16.mxu0 0
  %1165 = vmatmul.mubr.bf16.gmra.mxu0 %v1060
  %v1166 = vpop.f32.mrf.mxu0
  %v1167 = vadd.f32 %v1019, %v1166
  %v1168 = vpop.f32.mrf.mxu0
  %v1169 = vpop.f32.mrf.mxu0
  %v1170 = vadd.f32 %v1019, %v1169
  %v1171 = vpop.f32.mrf.mxu0
  %1172 = vmatprep.mubr.bf16.mxu0 0
  %1173 = vmatmul.mubr.bf16.gmra.mxu0 %v1063
  %v1174 = vpop.f32.mrf.mxu0
  %v1175 = vadd.f32 %v1019, %v1174
  %v1176 = vpop.f32.mrf.mxu0
  %v1177 = vpop.f32.mrf.mxu0
  %v1178 = vadd.f32 %v1019, %v1177
  %v1179 = vpop.f32.mrf.mxu0
  %1180 = vmatprep.mubr.bf16.mxu0 0
  %1181 = vmatmul.mubr.bf16.gmra.mxu0 %v1066
  %v1182 = vpop.f32.mrf.mxu0
  %v1183 = vadd.f32 %v1019, %v1182
  %v1184 = vpop.f32.mrf.mxu0
  %v1185 = vpop.f32.mrf.mxu0
  %v1186 = vadd.f32 %v1019, %v1185
  %v1187 = vpop.f32.mrf.mxu0
  %1188 = vmatprep.mubr.bf16.mxu0 0
  %1189 = vmatmul.mubr.bf16.gmra.mxu0 %v1069
  %v1190 = vpop.f32.mrf.mxu0
  %v1191 = vadd.f32 %v1019, %v1190
  %v1192 = vpop.f32.mrf.mxu0
  %v1193 = vpop.f32.mrf.mxu0
  %v1194 = vadd.f32 %v1019, %v1193
  %v1195 = vpop.f32.mrf.mxu0
  %1196 = vmatprep.mubr.bf16.mxu0 0
  %1197 = vmatmul.mubr.bf16.gmra.mxu0 %v1072
  %v1198 = vpop.f32.mrf.mxu0
  %v1199 = vadd.f32 %v1019, %v1198
  %v1200 = vpop.f32.mrf.mxu0
  %v1201 = vpop.f32.mrf.mxu0
  %v1202 = vadd.f32 %v1019, %v1201
  %v1203 = vpop.f32.mrf.mxu0
  %1204 = vmatprep.mubr.bf16.mxu0 0
  %1205 = vmatmul.mubr.bf16.gmra.mxu0 %v1075
  %v1206 = vpop.f32.mrf.mxu0
  %v1207 = vadd.f32 %v1019, %v1206
  %v1208 = vpop.f32.mrf.mxu0
  %v1209 = vpop.f32.mrf.mxu0
  %v1210 = vadd.f32 %v1019, %v1209
  %v1211 = vpop.f32.mrf.mxu0
  %1212 = vmatprep.mubr.bf16.mxu0 0
  %1213 = vmatmul.mubr.bf16.gmra.mxu0 %v1078
  %v1214 = vpop.f32.mrf.mxu0
  %v1215 = vadd.f32 %v1019, %v1214
  %v1216 = vpop.f32.mrf.mxu0
  %v1217 = vpop.f32.mrf.mxu0
  %v1218 = vadd.f32 %v1019, %v1217
  %v1219 = vpop.f32.mrf.mxu0
  %1220 = vmatprep.mubr.bf16.mxu0 0
  %1221 = vmatmul.mubr.bf16.gmra.mxu0 %v1081
  %v1222 = vpop.f32.mrf.mxu0
  %v1223 = vadd.f32 %v1019, %v1222
  %v1224 = vpop.f32.mrf.mxu0
  %v1225 = vpop.f32.mrf.mxu0
  %v1226 = vadd.f32 %v1019, %v1225
  %v1227 = vpop.f32.mrf.mxu0
  %1228 = vmatprep.mubr.bf16.mxu0 0
  %1229 = vmatmul.mubr.bf16.gmra.mxu0 %v1084
  %v1230 = vpop.f32.mrf.mxu0
  %v1231 = vadd.f32 %v1019, %v1230
  %v1232 = vpop.f32.mrf.mxu0
  %v1233 = vpop.f32.mrf.mxu0
  %v1234 = vadd.f32 %v1019, %v1233
  %v1235 = vpop.f32.mrf.mxu0
  %1236 = vmatprep.mubr.bf16.mxu0 0
  %1237 = vmatmul.mubr.bf16.gmra.mxu0 %v1087
  %v1238 = vpop.f32.mrf.mxu0
  %v1239 = vadd.f32 %v1019, %v1238
  %v1240 = vpop.f32.mrf.mxu0
  %v1241 = vpop.f32.mrf.mxu0
  %v1242 = vadd.f32 %v1019, %v1241
  %v1243 = vpop.f32.mrf.mxu0
  %1244 = vmatprep.mubr.bf16.mxu0 0
  %1245 = vmatmul.mubr.bf16.gmra.mxu0 %v1090
  %v1246 = vpop.f32.mrf.mxu0
  %v1247 = vadd.f32 %v1019, %v1246
  %v1248 = vpop.f32.mrf.mxu0
  %v1249 = vpop.f32.mrf.mxu0
  %v1250 = vadd.f32 %v1019, %v1249
  %v1251 = vpop.f32.mrf.mxu0
  %1252 = vdwg.mxu0
  %v1253 = vmax.f32 %v1127, 0.0
  %v1254 = vmax.f32 %v1130, 0.0
  %v1255 = vmax.f32 %v1135, 0.0
  %v1256 = vmax.f32 %v1138, 0.0
  %v1257 = vmax.f32 %v1143, 0.0
  %v1258 = vmax.f32 %v1146, 0.0
  %v1259 = vmax.f32 %v1151, 0.0
  %v1260 = vmax.f32 %v1154, 0.0
  %v1261 = vmax.f32 %v1159, 0.0
  %v1262 = vmax.f32 %v1162, 0.0
  %v1263 = vmax.f32 %v1167, 0.0
  %v1264 = vmax.f32 %v1170, 0.0
  %v1265 = vmax.f32 %v1175, 0.0
  %v1266 = vmax.f32 %v1178, 0.0
  %v1267 = vmax.f32 %v1183, 0.0
  %v1268 = vmax.f32 %v1186, 0.0
  %v1269 = vmax.f32 %v1191, 0.0
  %v1270 = vmax.f32 %v1194, 0.0
  %v1271 = vmax.f32 %v1199, 0.0
  %v1272 = vmax.f32 %v1202, 0.0
  %v1273 = vmax.f32 %v1207, 0.0
  %v1274 = vmax.f32 %v1210, 0.0
  %v1275 = vmax.f32 %v1215, 0.0
  %v1276 = vmax.f32 %v1218, 0.0
  %v1277 = vmax.f32 %v1223, 0.0
  %v1278 = vmax.f32 %v1226, 0.0
  %v1279 = vmax.f32 %v1231, 0.0
  %v1280 = vmax.f32 %v1234, 0.0
  %v1281 = vmax.f32 %v1239, 0.0
  %v1282 = vmax.f32 %v1242, 0.0
  %v1283 = vmax.f32 %v1247, 0.0
  %v1284 = vmax.f32 %v1250, 0.0
  %v1285 = vpack.c.bf16 %v1254, %v1253
  %v1286 = vpack.c.bf16 %v1256, %v1255
  %v1287 = vpack.c.bf16 %v1258, %v1257
  %v1288 = vpack.c.bf16 %v1260, %v1259
  %v1289 = vpack.c.bf16 %v1262, %v1261
  %v1290 = vpack.c.bf16 %v1264, %v1263
  %v1291 = vpack.c.bf16 %v1266, %v1265
  %v1292 = vpack.c.bf16 %v1268, %v1267
  %v1293 = vpack.c.bf16 %v1270, %v1269
  %v1294 = vpack.c.bf16 %v1272, %v1271
  %v1295 = vpack.c.bf16 %v1274, %v1273
  %v1296 = vpack.c.bf16 %v1276, %v1275
  %v1297 = vpack.c.bf16 %v1278, %v1277
  %v1298 = vpack.c.bf16 %v1280, %v1279
  %v1299 = vpack.c.bf16 %v1282, %v1281
  %v1300 = vpack.c.bf16 %v1284, %v1283
  %v1301 = vld [vmem:[%s5] sm:$0xf]
  %v1302 = vld [vmem:[%s5 + $0x4] sm:$0xf]
  %v1303 = vld [vmem:[%s5 + $0x8] sm:$0xf]
  %v1304 = vld [vmem:[%s5 + $0xc] sm:$0xf]
  %v1305 = vld [vmem:[%s5 + $0x10] sm:$0xf]
  %v1306 = vld [vmem:[%s5 + $0x14] sm:$0xf]
  %v1307 = vld [vmem:[%s5 + $0x18] sm:$0xf]
  %v1308 = vld [vmem:[%s5 + $0x1c] sm:$0xf]
  %v1309 = vld [vmem:[%s6 + $0x4] sm:$0x1]
  %v1310 = vlaneseq
  %v1311 = vshrl.u32 %v1310, 7
  %v1312 = vsub.s32 0, %v1311
  %v1313 = vrot.slane %v1309, %v1312
  %v1322 = vunpack.c.l.b16 %v1301
  %v1323 = vunpack.c.l.b16 %v1302
  %v1324 = vunpack.c.l.b16 %v1303
  %v1325 = vunpack.c.l.b16 %v1304
  %v1326 = vunpack.c.l.b16 %v1305
  %v1327 = vunpack.c.l.b16 %v1306
  %v1328 = vunpack.c.l.b16 %v1307
  %v1329 = vunpack.c.l.b16 %v1308
  %v1330 = vpack.c.b16 %v1323, %v1322
  %v1331 = vpack.c.b16 %v1325, %v1324
  %v1332 = vpack.c.b16 %v1327, %v1326
  %v1333 = vpack.c.b16 %v1329, %v1328
  %v1339 = vsel %vm455, %v1285, 0
  %v1342 = vsel %vm455, %v1286, 0
  %v1345 = vsel %vm455, %v1287, 0
  %v1348 = vsel %vm455, %v1288, 0
  %v1351 = vsel %vm455, %v1289, 0
  %v1354 = vsel %vm455, %v1290, 0
  %v1357 = vsel %vm455, %v1291, 0
  %v1360 = vsel %vm455, %v1292, 0
  %v1363 = vsel %vm455, %v1293, 0
  %v1366 = vsel %vm455, %v1294, 0
  %v1369 = vsel %vm455, %v1295, 0
  %v1372 = vsel %vm455, %v1296, 0
  %v1375 = vsel %vm455, %v1297, 0
  %v1378 = vsel %vm455, %v1298, 0
  %v1381 = vsel %vm455, %v1299, 0
  %v1384 = vsel %vm455, %v1300, 0
  %1386 = vmatprep.subr.bf16.mxu0 0
  %1387 = vmatpush1.bf16.msra.mxu0 0
  %1388 = vmatprep.subr.bf16.mxu0 0
  %1389 = vmatpush1.bf16.msra.mxu0 0
  %1390 = vmatprep.subr.bf16.mxu0 0
  %1391 = vmatpush1.bf16.msra.mxu0 0
  %1392 = vmatprep.subr.bf16.mxu0 0
  %1393 = vmatpush1.bf16.msra.mxu0 0
  %1394 = vmatprep.subr.bf16.mxu0 0
  %1395 = vmatpush1.bf16.msra.mxu0 %v1333
  %1396 = vmatprep.subr.bf16.mxu0 0
  %1397 = vmatpush1.bf16.msra.mxu0 %v1332
  %1398 = vmatprep.subr.bf16.mxu0 0
  %1399 = vmatpush1.bf16.msra.mxu0 %v1331
  %1400 = vmatprep.subr.bf16.mxu0 0
  %1401 = vmatpush1.bf16.msra.mxu0 %v1330
  %1402 = vmatprep.subr.bf16.mxu0 0
  %1403 = vmatpush2.bf16.msra.mxu0 0
  %1404 = vmatprep.subr.bf16.mxu0 0
  %1405 = vmatpush2.bf16.msra.mxu0 0
  %1406 = vmatprep.subr.bf16.mxu0 0
  %1407 = vmatpush2.bf16.msra.mxu0 0
  %1408 = vmatprep.subr.bf16.mxu0 0
  %1409 = vmatpush2.bf16.msra.mxu0 0
  %1410 = vmatprep.subr.bf16.mxu0 0
  %1411 = vmatpush2.bf16.msra.mxu0 0
  %1412 = vmatprep.subr.bf16.mxu0 0
  %1413 = vmatpush2.bf16.msra.mxu0 0
  %1414 = vmatprep.subr.bf16.mxu0 0
  %1415 = vmatpush2.bf16.msra.mxu0 0
  %1416 = vmatprep.subr.bf16.mxu0 0
  %1417 = vmatpush2.bf16.msra.mxu0 0
  %1418 = vmatprep.mubr.bf16.mxu0 0
  %1419 = vmatmul.mubr.bf16.gmra.mxu0 %v1339
  %v1420 = vpop.f32.mrf.mxu0
  %v1421 = vadd.f32 %v1313, %v1420
  %v1422 = vpop.f32.mrf.mxu0
  %v1423 = vpop.f32.mrf.mxu0
  %v1424 = vadd.f32 %v1313, %v1423
  %v1425 = vpop.f32.mrf.mxu0
  %1426 = vmatprep.mubr.bf16.mxu0 0
  %1427 = vmatmul.mubr.bf16.gmra.mxu0 %v1342
  %v1428 = vpop.f32.mrf.mxu0
  %v1429 = vadd.f32 %v1313, %v1428
  %v1430 = vpop.f32.mrf.mxu0
  %v1431 = vpop.f32.mrf.mxu0
  %v1432 = vadd.f32 %v1313, %v1431
  %v1433 = vpop.f32.mrf.mxu0
  %1434 = vmatprep.mubr.bf16.mxu0 0
  %1435 = vmatmul.mubr.bf16.gmra.mxu0 %v1345
  %v1436 = vpop.f32.mrf.mxu0
  %v1437 = vadd.f32 %v1313, %v1436
  %v1438 = vpop.f32.mrf.mxu0
  %v1439 = vpop.f32.mrf.mxu0
  %v1440 = vadd.f32 %v1313, %v1439
  %v1441 = vpop.f32.mrf.mxu0
  %1442 = vmatprep.mubr.bf16.mxu0 0
  %1443 = vmatmul.mubr.bf16.gmra.mxu0 %v1348
  %v1444 = vpop.f32.mrf.mxu0
  %v1445 = vadd.f32 %v1313, %v1444
  %v1446 = vpop.f32.mrf.mxu0
  %v1447 = vpop.f32.mrf.mxu0
  %v1448 = vadd.f32 %v1313, %v1447
  %v1449 = vpop.f32.mrf.mxu0
  %1450 = vmatprep.mubr.bf16.mxu0 0
  %1451 = vmatmul.mubr.bf16.gmra.mxu0 %v1351
  %v1452 = vpop.f32.mrf.mxu0
  %v1453 = vadd.f32 %v1313, %v1452
  %v1454 = vpop.f32.mrf.mxu0
  %v1455 = vpop.f32.mrf.mxu0
  %v1456 = vadd.f32 %v1313, %v1455
  %v1457 = vpop.f32.mrf.mxu0
  %1458 = vmatprep.mubr.bf16.mxu0 0
  %1459 = vmatmul.mubr.bf16.gmra.mxu0 %v1354
  %v1460 = vpop.f32.mrf.mxu0
  %v1461 = vadd.f32 %v1313, %v1460
  %v1462 = vpop.f32.mrf.mxu0
  %v1463 = vpop.f32.mrf.mxu0
  %v1464 = vadd.f32 %v1313, %v1463
  %v1465 = vpop.f32.mrf.mxu0
  %1466 = vmatprep.mubr.bf16.mxu0 0
  %1467 = vmatmul.mubr.bf16.gmra.mxu0 %v1357
  %v1468 = vpop.f32.mrf.mxu0
  %v1469 = vadd.f32 %v1313, %v1468
  %v1470 = vpop.f32.mrf.mxu0
  %v1471 = vpop.f32.mrf.mxu0
  %v1472 = vadd.f32 %v1313, %v1471
  %v1473 = vpop.f32.mrf.mxu0
  %1474 = vmatprep.mubr.bf16.mxu0 0
  %1475 = vmatmul.mubr.bf16.gmra.mxu0 %v1360
  %v1476 = vpop.f32.mrf.mxu0
  %v1477 = vadd.f32 %v1313, %v1476
  %v1478 = vpop.f32.mrf.mxu0
  %v1479 = vpop.f32.mrf.mxu0
  %v1480 = vadd.f32 %v1313, %v1479
  %v1481 = vpop.f32.mrf.mxu0
  %1482 = vmatprep.mubr.bf16.mxu0 0
  %1483 = vmatmul.mubr.bf16.gmra.mxu0 %v1363
  %v1484 = vpop.f32.mrf.mxu0
  %v1485 = vadd.f32 %v1313, %v1484
  %v1486 = vpop.f32.mrf.mxu0
  %v1487 = vpop.f32.mrf.mxu0
  %v1488 = vadd.f32 %v1313, %v1487
  %v1489 = vpop.f32.mrf.mxu0
  %1490 = vmatprep.mubr.bf16.mxu0 0
  %1491 = vmatmul.mubr.bf16.gmra.mxu0 %v1366
  %v1492 = vpop.f32.mrf.mxu0
  %v1493 = vadd.f32 %v1313, %v1492
  %v1494 = vpop.f32.mrf.mxu0
  %v1495 = vpop.f32.mrf.mxu0
  %v1496 = vadd.f32 %v1313, %v1495
  %v1497 = vpop.f32.mrf.mxu0
  %1498 = vmatprep.mubr.bf16.mxu0 0
  %1499 = vmatmul.mubr.bf16.gmra.mxu0 %v1369
  %v1500 = vpop.f32.mrf.mxu0
  %v1501 = vadd.f32 %v1313, %v1500
  %v1502 = vpop.f32.mrf.mxu0
  %v1503 = vpop.f32.mrf.mxu0
  %v1504 = vadd.f32 %v1313, %v1503
  %v1505 = vpop.f32.mrf.mxu0
  %1506 = vmatprep.mubr.bf16.mxu0 0
  %1507 = vmatmul.mubr.bf16.gmra.mxu0 %v1372
  %v1508 = vpop.f32.mrf.mxu0
  %v1509 = vadd.f32 %v1313, %v1508
  %v1510 = vpop.f32.mrf.mxu0
  %v1511 = vpop.f32.mrf.mxu0
  %v1512 = vadd.f32 %v1313, %v1511
  %v1513 = vpop.f32.mrf.mxu0
  %1514 = vmatprep.mubr.bf16.mxu0 0
  %1515 = vmatmul.mubr.bf16.gmra.mxu0 %v1375
  %v1516 = vpop.f32.mrf.mxu0
  %v1517 = vadd.f32 %v1313, %v1516
  %v1518 = vpop.f32.mrf.mxu0
  %v1519 = vpop.f32.mrf.mxu0
  %v1520 = vadd.f32 %v1313, %v1519
  %v1521 = vpop.f32.mrf.mxu0
  %1522 = vmatprep.mubr.bf16.mxu0 0
  %1523 = vmatmul.mubr.bf16.gmra.mxu0 %v1378
  %v1524 = vpop.f32.mrf.mxu0
  %v1525 = vadd.f32 %v1313, %v1524
  %v1526 = vpop.f32.mrf.mxu0
  %v1527 = vpop.f32.mrf.mxu0
  %v1528 = vadd.f32 %v1313, %v1527
  %v1529 = vpop.f32.mrf.mxu0
  %1530 = vmatprep.mubr.bf16.mxu0 0
  %1531 = vmatmul.mubr.bf16.gmra.mxu0 %v1381
  %v1532 = vpop.f32.mrf.mxu0
  %v1533 = vadd.f32 %v1313, %v1532
  %v1534 = vpop.f32.mrf.mxu0
  %v1535 = vpop.f32.mrf.mxu0
  %v1536 = vadd.f32 %v1313, %v1535
  %v1537 = vpop.f32.mrf.mxu0
  %1538 = vmatprep.mubr.bf16.mxu0 0
  %1539 = vmatmul.mubr.bf16.gmra.mxu0 %v1384
  %v1540 = vpop.f32.mrf.mxu0
  %v1541 = vadd.f32 %v1313, %v1540
  %v1542 = vpop.f32.mrf.mxu0
  %v1543 = vpop.f32.mrf.mxu0
  %v1544 = vadd.f32 %v1313, %v1543
  %v1545 = vpop.f32.mrf.mxu0
  %1546 = vdwg.mxu0
  %1547 = vst [vmem:[%s7] sm:$0xff] %v1421
  %1548 = vst [vmem:[%s7 + $0x8] sm:$0xff] %v1424
  %1549 = vst [vmem:[%s7 + $0x10] sm:$0xff] %v1429
  %1550 = vst [vmem:[%s7 + $0x18] sm:$0xff] %v1432
  %1551 = vst [vmem:[%s7 + $0x20] sm:$0xff] %v1437
  %1552 = vst [vmem:[%s7 + $0x28] sm:$0xff] %v1440
  %1553 = vst [vmem:[%s7 + $0x30] sm:$0xff] %v1445
  %1554 = vst [vmem:[%s7 + $0x38] sm:$0xff] %v1448
  %1555 = vst [vmem:[%s7 + $0x40] sm:$0xff] %v1453
  %1556 = vst [vmem:[%s7 + $0x48] sm:$0xff] %v1456
  %1557 = vst [vmem:[%s7 + $0x50] sm:$0xff] %v1461
  %1558 = vst [vmem:[%s7 + $0x58] sm:$0xff] %v1464
  %1559 = vst [vmem:[%s7 + $0x60] sm:$0xff] %v1469
  %1560 = vst [vmem:[%s7 + $0x68] sm:$0xff] %v1472
  %1561 = vst [vmem:[%s7 + $0x70] sm:$0xff] %v1477
  %1562 = vst [vmem:[%s7 + $0x78] sm:$0xff] %v1480
  %1563 = vst [vmem:[%s7 + $0x80] sm:$0xff] %v1485
  %1564 = vst [vmem:[%s7 + $0x88] sm:$0xff] %v1488
  %1565 = vst [vmem:[%s7 + $0x90] sm:$0xff] %v1493
  %1566 = vst [vmem:[%s7 + $0x98] sm:$0xff] %v1496
  %1567 = vst [vmem:[%s7 + $0xa0] sm:$0xff] %v1501
  %1568 = vst [vmem:[%s7 + $0xa8] sm:$0xff] %v1504
  %1569 = vst [vmem:[%s7 + $0xb0] sm:$0xff] %v1509
  %1570 = vst [vmem:[%s7 + $0xb8] sm:$0xff] %v1512
  %1571 = vst [vmem:[%s7 + $0xc0] sm:$0xff] %v1517
  %1572 = vst [vmem:[%s7 + $0xc8] sm:$0xff] %v1520
  %1573 = vst [vmem:[%s7 + $0xd0] sm:$0xff] %v1525
  %1574 = vst [vmem:[%s7 + $0xd8] sm:$0xff] %v1528
  %1575 = vst [vmem:[%s7 + $0xe0] sm:$0xff] %v1533
  %1576 = vst [vmem:[%s7 + $0xe8] sm:$0xff] %v1536
  %1577 = vst [vmem:[%s7 + $0xf0] sm:$0xff] %v1541
  %1578 = vst [vmem:[%s7 + $0xf8] sm:$0xff] %v1544
  // Predicated region
  $region30: #{_lambda_.1} parent=0 // pred_check
    _
  $region31: #{_lambda_.1} parent=0 // pred_check_branch
    %1580 = sbr.rel (0) target = $region33
  $region32: #{_lambda_.1} parent=0 // pred_region
    _
  $region33: #{_lambda_.1} parent=0 // pred_fallthru
    _
  // Predicated region
  $region34: #{_lambda_.1} parent=0 // pred_check
    _
  $region35: #{_lambda_.1} parent=0 // pred_check_branch
    %1582 = sbr.rel (0) target = $region37
  $region36: #{_lambda_.1} parent=0 // pred_region
    _
  $region37: #{_lambda_.1} parent=0 // pred_fallthru
    _

</llo_original>
